<compile_context>
chip_gen: v7x
topology: tpu7x:2x2x1
jax: 0.10.0
libtpu: 0.0.40
codegen_flags: <defaults>
</compile_context>

<pallas_src>
import functools
import math

import jax
import jax.numpy as jnp
from jax.experimental import pallas as pl
from jax.experimental.pallas import tpu as pltpu

HIDDEN = 128
SUB = 16           # row-region alignment inside packed blobs (bf16 sublane pack = 16)
MAX_TILE_B = 512   # batch-tile rows; sized for v7x's 64 MiB VMEM, fine on v5e/v6e


def _round_up(n, m):
    return ((n + m - 1) // m) * m


def _ddqn_kernel(state_ref, pa_ref, pb_ref, out_ref, psum_ref, *,
                 s_pad, action_size, batch, tile_b):
    H = HIDDEN
    A = action_size
    wdt = pa_ref.dtype

    # ---- packed-parameter layout (all row offsets SUB-aligned) --------------
    # pa_ref (width 128):
    #   [0, s_pad)                    : W1 (state -> 128), zero-padded rows
    #   [s_pad, s_pad+SUB)            : b1 in row 0
    #   [s_pad+SUB, s_pad+SUB+256)    : W2 block-diag (value -> lane A,
    #                                   advantage -> lanes 0..A-1)
    #   [s_pad+SUB+256, +SUB)         : b2 in row 0 (lanes 0..A-1 = ba2, lane A = bv2)
    # pb_ref (width 256):
    #   [0, 128)   : W_h = [Wv1 | Wa1]
    #   [128, 144) : b_h in row 0 = [bv1 | ba1]
    w1 = pa_ref[0:s_pad, :]
    b1 = pa_ref[s_pad:s_pad + 1, :].astype(jnp.float32)
    w2 = pa_ref[s_pad + SUB:s_pad + SUB + 2 * H, :]
    b2 = pa_ref[s_pad + SUB + 2 * H:s_pad + SUB + 2 * H + 1, :].astype(jnp.float32)
    wh = pb_ref[0:H, :]
    bh = pb_ref[H:H + 1, :].astype(jnp.float32)

    # Shared feature extractor: Linear(state, 128) + ReLU.
    x = jnp.dot(state_ref[...].astype(wdt), w1, preferred_element_type=jnp.float32)
    x = jnp.maximum(x + b1, 0.0)                                     # (TB, 128) f32

    # Fused value+advantage hidden layer: Linear(128, 256) + ReLU.
    h = jnp.dot(x.astype(wdt), wh, preferred_element_type=jnp.float32)
    h = jnp.maximum(h + bh, 0.0)                                     # (TB, 256) f32

    # Fused output layer: lanes 0..A-1 = advt, lane A = val, lanes > A exactly 0.
    y = jnp.dot(h.astype(wdt), w2, preferred_element_type=jnp.float32) + b2   # (TB, 128)

    # Value stream via static one-lane slice (no lane mask, no masked reduce).
    val = y[:, A:A + 1]                                              # (TB, 1)

    # Lane-dense store; lanes >= A hold junk (val / 2*val), sliced off in wrapper.
    out_ref[...] = y + val

    # Per-tile partial sum of advt for the global mean.  Lanes > A of y are
    # exactly zero, so sum_lanes(y) - val == sum(advt) per row.
    row_adv = jnp.sum(y, axis=1, keepdims=True) - val                # (TB, 1)
    if batch % tile_b != 0:   # compile-time branch: mask zero-padded batch rows
        rows = (pl.program_id(0) * tile_b
                + jax.lax.broadcasted_iota(jnp.int32, row_adv.shape, 0))
        row_adv = jnp.where(rows < batch, row_adv, 0.0)
    tile_sum = jnp.sum(row_adv, keepdims=True)                       # (1, 1)
    psum_ref[...] = jnp.broadcast_to(tile_sum, (8, H))


def pack_params(params, state_size, action_size, dtype=jnp.bfloat16):
    """Pack the 11 parameter tensors into two aligned blobs (done once).

    dtype=bfloat16 halves the weight DMA that is re-fetched on every forward
    call and uses the MXU's native bf16 path (f32 accumulate); pass
    jnp.float32 for bit-tight numerics.
    """
    H = HIDDEN
    A = action_size
    assert A <= HIDDEN - 1, "packing routes the value stream to lane A; need action_size <= 127"
    s_pad = _round_up(state_size, SUB)

    w1p = jnp.zeros((s_pad, H), jnp.float32).at[:state_size, :].set(params["w1"])
    b1p = jnp.zeros((SUB, H), jnp.float32).at[0:1, :].set(params["b1"])

    w2 = jnp.zeros((2 * H, H), jnp.float32)
    w2 = w2.at[0:H, A:A + 1].set(params["wv2"])        # value stream  -> lane A
    w2 = w2.at[H:2 * H, 0:A].set(params["wa2"])        # advantage     -> lanes 0..A-1
    b2 = jnp.zeros((SUB, H), jnp.float32)
    b2 = b2.at[0, A].set(params["bv2"][0, 0])
    b2 = b2.at[0, 0:A].set(params["ba2"][0, :])

    blob_a = jnp.concatenate([w1p, b1p, w2, b2], axis=0).astype(dtype)   # (s_pad+288, 128)

    wh = jnp.concatenate([params["wv1"], params["wa1"]], axis=1)         # (128, 256)
    bh = jnp.zeros((SUB, 2 * H), jnp.float32)
    bh = bh.at[0:1, 0:H].set(params["bv1"]).at[0:1, H:2 * H].set(params["ba1"])
    blob_b = jnp.concatenate([wh, bh], axis=0).astype(dtype)             # (144, 256)

    return dict(blob_a=blob_a, blob_b=blob_b,
                state_size=state_size, action_size=action_size, s_pad=s_pad)


def _choose_tile(batch):
    b8 = _round_up(batch, 8)
    return b8 if b8 <= MAX_TILE_B else MAX_TILE_B


@functools.partial(jax.jit, static_argnames=("state_size", "action_size", "s_pad"))
def _ddqn_forward_packed(state, blob_a, blob_b, *, state_size, action_size, s_pad):
    B = state.shape[0]
    H = HIDDEN
    TB = _choose_tile(B)
    B_pad = _round_up(B, TB)
    num_tiles = B_pad // TB

    # Pad only when actually needed (padded W1 rows are zero, so pad is inert).
    if B_pad != B or s_pad != state_size:
        state_in = jnp.zeros((B_pad, s_pad), state.dtype).at[:B, :state_size].set(state)
    else:
        state_in = state

    kernel = functools.partial(_ddqn_kernel, s_pad=s_pad, action_size=action_size,
                               batch=B, tile_b=TB)

    out_padded, psums = pl.pallas_call(
        kernel,
        grid=(num_tiles,),
        out_shape=(
            jax.ShapeDtypeStruct((B_pad, H), jnp.float32),          # lane-dense q slab
            jax.ShapeDtypeStruct((num_tiles * 8, H), jnp.float32),  # per-tile sum(advt)
        ),
        in_specs=[
            pl.BlockSpec((TB, s_pad), lambda i: (i, 0)),
            pl.BlockSpec(blob_a.shape, lambda i: (0, 0)),   # weights stay resident across tiles
            pl.BlockSpec(blob_b.shape, lambda i: (0, 0)),
        ],
        out_specs=(
            pl.BlockSpec((TB, H), lambda i: (i, 0)),
            pl.BlockSpec((8, H), lambda i: (i, 0)),
        ),
        compiler_params=pltpu.CompilerParams(
            dimension_semantics=("parallel",)),               # v7x dual-TC batch sharding
    )(state_in, blob_a, blob_b)

    # Global advt mean (couples batch tiles) + broadcast-subtract in XLA.
    sum_advt = jnp.sum(psums.reshape(num_tiles, 8, H)[:, 0, 0])
    mean_advt = sum_advt / (B * action_size)
    return out_padded[:B, :action_size] - mean_advt


def ddqn_forward(state, packed):
    return _ddqn_forward_packed(
        state, packed["blob_a"], packed["blob_b"],
        state_size=packed["state_size"],
        action_size=packed["action_size"],
        s_pad=packed["s_pad"])


def init_params(state_size, action_size, seed=0):
    """Deterministic init mimicking PyTorch's default Linear init
    (uniform in [-1/sqrt(fan_in), 1/sqrt(fan_in)]). Weights stored as [in, out]."""
    key = jax.random.PRNGKey(seed)

    def linear(key, fan_in, fan_out):
        kw, kb = jax.random.split(key)
        bound = 1.0 / math.sqrt(fan_in)
        w = jax.random.uniform(kw, (fan_in, fan_out), jnp.float32, -bound, bound)
        b = jax.random.uniform(kb, (1, fan_out), jnp.float32, -bound, bound)
        return w, b

    keys = jax.random.split(key, 5)
    w1, b1 = linear(keys[0], state_size, HIDDEN)
    wv1, bv1 = linear(keys[1], HIDDEN, HIDDEN)
    wv2, bv2 = linear(keys[2], HIDDEN, 1)
    wa1, ba1 = linear(keys[3], HIDDEN, HIDDEN)
    wa2, ba2 = linear(keys[4], HIDDEN, action_size)
    return dict(w1=w1, b1=b1, wv1=wv1, bv1=bv1, wv2=wv2, bv2=bv2,
                wa1=wa1, ba1=ba1, wa2=wa2, ba2=ba2)


def ddqn_reference(state, p):
    """Pure-JAX reference for correctness checking (unfused, f32)."""
    x = jnp.maximum(state @ p["w1"] + p["b1"], 0.0)
    val = jnp.maximum(x @ p["wv1"] + p["bv1"], 0.0) @ p["wv2"] + p["bv2"]
    advt = jnp.maximum(x @ p["wa1"] + p["ba1"], 0.0) @ p["wa2"] + p["ba2"]
    return val + advt - jnp.mean(advt)


if __name__ == "__main__":
    batch = 8
    state_size = 16
    action_size = 4

    params = init_params(state_size, action_size, seed=0)
    state = jax.random.normal(jax.random.PRNGKey(0), (batch, state_size), jnp.float32)
    ref = ddqn_reference(state, params)

    # f32 blobs: bit-tight check of the fused kernel structure.
    packed_f32 = pack_params(params, state_size, action_size, dtype=jnp.float32)
    out_f32 = jax.block_until_ready(ddqn_forward(state, packed_f32))
    assert out_f32.shape == (batch, action_size)
    assert jnp.allclose(out_f32, ref, atol=1e-4, rtol=1e-4), "f32 mismatch vs reference"

    # bf16 blobs (default fast path): tolerance covers weight/activation rounding.
    packed_bf16 = pack_params(params, state_size, action_size, dtype=jnp.bfloat16)
    out_bf16 = jax.block_until_ready(ddqn_forward(state, packed_bf16))
    assert out_bf16.shape == (batch, action_size)
    assert jnp.allclose(out_bf16, ref, atol=5e-2, rtol=5e-2), "bf16 mismatch vs reference"

    print("KERNEL_OK")
</pallas_src>

<mosaic_0001>
module attributes {stable_mosaic.version = 11 : i64} {
  func.func @_ddqn_kernel(%arg0: i32, %arg1: memref<8x16xf32, #tpu.memory_space<vmem>>, %arg2: memref<304x128xf32, #tpu.memory_space<vmem>>, %arg3: memref<144x256xf32, #tpu.memory_space<vmem>>, %arg4: memref<8x128xf32, #tpu.memory_space<vmem>>, %arg5: memref<8x128xf32, #tpu.memory_space<vmem>>) attributes {dimension_semantics = [#tpu.dimension_semantics<parallel>], iteration_bounds = array<i64: 1>, scalar_prefetch = 0 : i64, scratch_operands = 0 : i64, tpu.core_type = #tpu.core_type<tc>, window_params = [{transform_indices = @transform_0, window_bounds = array<i64: 8, 16>}, {pipeline_mode = #tpu.pipeline_mode<synchronous>, transform_indices = @transform_1, window_bounds = array<i64: 304, 128>}, {pipeline_mode = #tpu.pipeline_mode<synchronous>, transform_indices = @transform_2, window_bounds = array<i64: 144, 256>}, {transform_indices = @transform_3, window_bounds = array<i64: 8, 128>}, {transform_indices = @transform_4, window_bounds = array<i64: 8, 128>}]} {
    %c0 = arith.constant 0 : index
    %c0_0 = arith.constant 0 : index
    %0 = vector.load %arg2[%c0, %c0_0] : memref<304x128xf32, #tpu.memory_space<vmem>>, vector<16x128xf32>
    %c16 = arith.constant 16 : index
    %c0_1 = arith.constant 0 : index
    %1 = vector.load %arg2[%c16, %c0_1] : memref<304x128xf32, #tpu.memory_space<vmem>>, vector<1x128xf32>
    %c32 = arith.constant 32 : index
    %c0_2 = arith.constant 0 : index
    %2 = vector.load %arg2[%c32, %c0_2] : memref<304x128xf32, #tpu.memory_space<vmem>>, vector<256x128xf32>
    %c288 = arith.constant 288 : index
    %c0_3 = arith.constant 0 : index
    %3 = vector.load %arg2[%c288, %c0_3] : memref<304x128xf32, #tpu.memory_space<vmem>>, vector<1x128xf32>
    %c0_4 = arith.constant 0 : index
    %c0_5 = arith.constant 0 : index
    %4 = vector.load %arg3[%c0_4, %c0_5] : memref<144x256xf32, #tpu.memory_space<vmem>>, vector<128x256xf32>
    %c128 = arith.constant 128 : index
    %c0_6 = arith.constant 0 : index
    %5 = vector.load %arg3[%c128, %c0_6] : memref<144x256xf32, #tpu.memory_space<vmem>>, vector<1x256xf32>
    %c0_7 = arith.constant 0 : index
    %c0_8 = arith.constant 0 : index
    %6 = vector.load %arg1[%c0_7, %c0_8] : memref<8x16xf32, #tpu.memory_space<vmem>>, vector<8x16xf32>
    %cst = arith.constant dense<0.000000e+00> : vector<8x128xf32>
    %7 = tpu.matmul %6, %0, %cst {dimension_numbers = #tpu.dot_dimension_numbers<[1], [0], [0], [1], [0, 0, 1, 1], [], []>} : vector<8x16xf32>, vector<16x128xf32>, vector<8x128xf32> -> vector<8x128xf32>
    %8 = vector.broadcast %1 : vector<1x128xf32> to vector<8x128xf32>
    %9 = arith.addf %7, %8 : vector<8x128xf32>
    %cst_9 = arith.constant 0.000000e+00 : f32
    %10 = vector.broadcast %cst_9 : f32 to vector<8x128xf32>
    %11 = arith.maximumf %9, %10 : vector<8x128xf32>
    %cst_10 = arith.constant dense<0.000000e+00> : vector<8x256xf32>
    %12 = tpu.matmul %11, %4, %cst_10 {dimension_numbers = #tpu.dot_dimension_numbers<[1], [0], [0], [1], [0, 0, 1, 1], [], []>} : vector<8x128xf32>, vector<128x256xf32>, vector<8x256xf32> -> vector<8x256xf32>
    %13 = vector.broadcast %5 : vector<1x256xf32> to vector<8x256xf32>
    %14 = arith.addf %12, %13 : vector<8x256xf32>
    %cst_11 = arith.constant 0.000000e+00 : f32
    %15 = vector.broadcast %cst_11 : f32 to vector<8x256xf32>
    %16 = arith.maximumf %14, %15 : vector<8x256xf32>
    %cst_12 = arith.constant dense<0.000000e+00> : vector<8x128xf32>
    %17 = tpu.matmul %16, %2, %cst_12 {dimension_numbers = #tpu.dot_dimension_numbers<[1], [0], [0], [1], [0, 0, 1, 1], [], []>} : vector<8x256xf32>, vector<256x128xf32>, vector<8x128xf32> -> vector<8x128xf32>
    %18 = vector.broadcast %3 : vector<1x128xf32> to vector<8x128xf32>
    %19 = arith.addf %17, %18 : vector<8x128xf32>
    %20 = vector.extract_strided_slice %19 {offsets = [0, 4], sizes = [8, 1], strides = [1, 1]} : vector<8x128xf32> to vector<8x1xf32>
    %21 = vector.broadcast %20 : vector<8x1xf32> to vector<8x128xf32>
    %22 = arith.addf %19, %21 : vector<8x128xf32>
    %c0_13 = arith.constant 0 : index
    %c0_14 = arith.constant 0 : index
    %23 = vector.load %arg4[%c0_13, %c0_14] : memref<8x128xf32, #tpu.memory_space<vmem>>, vector<8x128xf32>
    tpu.vector_store %arg4[%c0_13, %c0_14], %22 {strides = array<i32>} : memref<8x128xf32, #tpu.memory_space<vmem>>, vector<8x128xf32>,
    %cst_15 = arith.constant dense<0.000000e+00> : vector<8xf32>
    %24 = vector.multi_reduction <add>, %19, %cst_15 [1] : vector<8x128xf32> to vector<8xf32>
    %25 = vector.shape_cast %24 : vector<8xf32> to vector<8x1xf32>
    %26 = arith.subf %25, %20 : vector<8x1xf32>
    %27 = vector.shape_cast %26 : vector<8x1xf32> to vector<1x8x1xf32>
    %cst_16 = arith.constant dense<0.000000e+00> : vector<1xf32>
    %28 = vector.multi_reduction <add>, %27, %cst_16 [1, 2] : vector<1x8x1xf32> to vector<1xf32>
    %29 = vector.shape_cast %28 : vector<1xf32> to vector<1x1x1xf32>
    %30 = vector.extract %29[0, 0, 0] : f32 from vector<1x1x1xf32>
    %31 = vector.broadcast %30 : f32 to vector<1x1xf32>
    %32 = vector.shape_cast %31 : vector<1x1xf32> to vector<1x1xf32>
    %33 = vector.broadcast %32 : vector<1x1xf32> to vector<8x128xf32>
    %c0_17 = arith.constant 0 : index
    %c0_18 = arith.constant 0 : index
    %34 = vector.load %arg5[%c0_17, %c0_18] : memref<8x128xf32, #tpu.memory_space<vmem>>, vector<8x128xf32>
    tpu.vector_store %arg5[%c0_17, %c0_18], %33 {strides = array<i32>} : memref<8x128xf32, #tpu.memory_space<vmem>>, vector<8x128xf32>,
    return
  }
  func.func @transform_0(%arg0: i32) -> (i32, i32) {
    %c0_i32 = arith.constant 0 : i32
    %c0_i32_0 = arith.constant 0 : i32
    return %arg0, %c0_i32 : i32, i32
  }
  func.func @transform_1(%arg0: i32) -> (i32, i32) {
    %c0_i32 = arith.constant 0 : i32
    %c0_i32_0 = arith.constant 0 : i32
    %c0_i32_1 = arith.constant 0 : i32
    return %c0_i32, %c0_i32_0 : i32, i32
  }
  func.func @transform_2(%arg0: i32) -> (i32, i32) {
    %c0_i32 = arith.constant 0 : i32
    %c0_i32_0 = arith.constant 0 : i32
    %c0_i32_1 = arith.constant 0 : i32
    return %c0_i32, %c0_i32_0 : i32, i32
  }
  func.func @transform_3(%arg0: i32) -> (i32, i32) {
    %c0_i32 = arith.constant 0 : i32
    %c0_i32_0 = arith.constant 0 : i32
    return %arg0, %c0_i32 : i32, i32
  }
  func.func @transform_4(%arg0: i32) -> (i32, i32) {
    %c0_i32 = arith.constant 0 : i32
    %c0_i32_0 = arith.constant 0 : i32
    return %arg0, %c0_i32 : i32, i32
  }
}

</mosaic_0001>

<llo_original>
// kernel: _ddqn_forward_packed.1
$region0: #{_ddqn_forward_packed.1}
  #allocation0 [shape = 'u32[]', space=smem, size = 0x4, offset = 0x4, fixed_abs, tag = 'smem constant byte address 0x4 - core index']
  #allocation1 [shape = 'u32[144,128]{1,0:T(1,128)}', space=vmem, size = 0x12000, scoped, tag = 'internal scratch']
  %s0 = inlined_call_operand.hbm [shape: f32[8,16], index: 0, kind: input, shape index: {}]
  %s1 = inlined_call_operand.hbm [shape: f32[304,128], index: 1, kind: input, shape index: {}]
  %s2 = inlined_call_operand.hbm [shape: f32[144,256], index: 2, kind: input, shape index: {}]
  %s3 = inlined_call_operand.vmem [shape: f32[8,128], index: 3, kind: output, shape index: {0}]
  %s4 = inlined_call_operand.vmem [shape: f32[8,128], index: 4, kind: output, shape index: {1}]
  %5 = xla_tuple %s3, %s4
  %s6 = sld [smem:[#allocation0]]
  $region42: #{_ddqn_forward_packed.1} parent=0
    _
  %s8 = ssub.s32 1, %s6
  %s9 = scalar_select 0, %s8, %s6
  $region1: #{_ddqn_forward_packed.1} parent=0
    #allocation2 [shape = 'u8[4096]{0}', space=vmem, size = 0x1000, scoped, tag = 'input window, operand 0, single buffered']
    #allocation3 [shape = 's32[1]{0}', space=sflag, size = 0x4, scoped, tag = 'scoped memory for _ddqn_forward_packed.1']
    #allocation4 [shape = 'u8[155648]{0}', space=vmem, size = 0x26000, scoped, tag = 'input window, operand 1, single buffered']
    #allocation5 [shape = 's32[1]{0}', space=sflag, size = 0x4, scoped, tag = 'scoped memory for _ddqn_forward_packed.1']
    #allocation6 [shape = 'u8[147456]{0}', space=vmem, size = 0x24000, scoped, tag = 'input window, operand 2, single buffered']
    %10 = vsyncpa [#allocation3], 0
    %11 = vsyncpa [#allocation5], 0
    // Predicated region
    $region2: #{_ddqn_forward_packed.1} parent=1 // pred_check
      _
    $region3: #{_ddqn_forward_packed.1} parent=1 // pred_check_branch
      %13 = sbr.rel (0) target = $region5
    $region4: #{_ddqn_forward_packed.1} parent=1 // pred_region
      %s15 = ssub.s32 128, 128
      %16 = vsyncadd [#allocation3], %s15
      %s18 = sshll.u32 [#allocation2], 4
      %s19 = int_to_ptr.vmem [resolvable:$true] %s18
      %21 = dma.hbm_to_vmem [thread:$0]  %s0, 128, %s19, [#allocation3]
    $region5: #{_ddqn_forward_packed.1} parent=1 // pred_fallthru
      _
    // Predicated region
    $region6: #{_ddqn_forward_packed.1} parent=1 // pred_check
      _
    $region7: #{_ddqn_forward_packed.1} parent=1 // pred_check_branch
      %23 = sbr.rel (0) target = $region9
    $region8: #{_ddqn_forward_packed.1} parent=1 // pred_region
      %s25 = ssub.s32 4864, 4864
      %26 = vsyncadd [#allocation5], %s25
      %s27 = sshll.u32 [#allocation4], 4
      %s28 = int_to_ptr.vmem [resolvable:$true] %s27
      %33 = dma.hbm_to_vmem [thread:$0]  %s1, 4864, %s28, [#allocation5], 128, 128, 8
    $region9: #{_ddqn_forward_packed.1} parent=1 // pred_fallthru
      _
    // Predicated region
    $region10: #{_ddqn_forward_packed.1} parent=1 // pred_check
      _
    $region11: #{_ddqn_forward_packed.1} parent=1 // pred_check_branch
      %35 = sbr.rel (0) target = $region13
    $region12: #{_ddqn_forward_packed.1} parent=1 // pred_region
      %s37 = ssub.s32 4608, 4608
      %38 = vsyncadd [#allocation5], %s37
      %s39 = sshll.u32 [#allocation6], 4
      %s40 = int_to_ptr.vmem [resolvable:$true] %s39
      %45 = dma.hbm_to_vmem [thread:$0]  %s2, 4608, %s40, [#allocation5], 256, 256, 16
    $region13: #{_ddqn_forward_packed.1} parent=1 // pred_fallthru
      _
    // Predicated region
    $region14: #{_ddqn_forward_packed.1} parent=1 // pred_check
      _
    $region15: #{_ddqn_forward_packed.1} parent=1 // pred_check_branch
      %47 = sbr.rel (0) target = $region17
    $region16: #{_ddqn_forward_packed.1} parent=1 // pred_region
      %48 = dma.done [#allocation3], 128
    $region17: #{_ddqn_forward_packed.1} parent=1 // pred_fallthru
      _
    // Predicated region
    $region18: #{_ddqn_forward_packed.1} parent=1 // pred_check
      _
    $region19: #{_ddqn_forward_packed.1} parent=1 // pred_check_branch
      %50 = sbr.rel (0) target = $region21
    $region20: #{_ddqn_forward_packed.1} parent=1 // pred_region
      %51 = dma.done [#allocation5], 4864
    $region21: #{_ddqn_forward_packed.1} parent=1 // pred_fallthru
      _
    // Predicated region
    $region22: #{_ddqn_forward_packed.1} parent=1 // pred_check
      _
    $region23: #{_ddqn_forward_packed.1} parent=1 // pred_check_branch
      %53 = sbr.rel (0) target = $region25
    $region24: #{_ddqn_forward_packed.1} parent=1 // pred_region
      %54 = dma.done [#allocation5], 4608
    $region25: #{_ddqn_forward_packed.1} parent=1 // pred_fallthru
      _
    %v55 = vld [vmem:[#allocation4] sm:$0xff]
    %v56 = vld [vmem:[#allocation4 + $0x8] sm:$0xff]
    %v57 = vld [vmem:[#allocation4 + $0x10] sm:$0x1]
    %v58 = vld [vmem:[#allocation4 + $0x20] sm:$0xff]
    %v59 = vld [vmem:[#allocation4 + $0x28] sm:$0xff]
    %v60 = vld [vmem:[#allocation4 + $0x30] sm:$0xff]
    %v61 = vld [vmem:[#allocation4 + $0x38] sm:$0xff]
    %v62 = vld [vmem:[#allocation4 + $0x40] sm:$0xff]
    %v63 = vld [vmem:[#allocation4 + $0x48] sm:$0xff]
    %v64 = vld [vmem:[#allocation4 + $0x50] sm:$0xff]
    %v65 = vld [vmem:[#allocation4 + $0x58] sm:$0xff]
    %v66 = vld [vmem:[#allocation4 + $0x60] sm:$0xff]
    %v67 = vld [vmem:[#allocation4 + $0x68] sm:$0xff]
    %v68 = vld [vmem:[#allocation4 + $0x70] sm:$0xff]
    %v69 = vld [vmem:[#allocation4 + $0x78] sm:$0xff]
    %v70 = vld [vmem:[#allocation4 + $0x80] sm:$0xff]
    %v71 = vld [vmem:[#allocation4 + $0x88] sm:$0xff]
    %v72 = vld [vmem:[#allocation4 + $0x90] sm:$0xff]
    %v73 = vld [vmem:[#allocation4 + $0x98] sm:$0xff]
    %v74 = vld [vmem:[#allocation4 + $0xa0] sm:$0xff]
    %v75 = vld [vmem:[#allocation4 + $0xa8] sm:$0xff]
    %v76 = vld [vmem:[#allocation4 + $0xb0] sm:$0xff]
    %v77 = vld [vmem:[#allocation4 + $0xb8] sm:$0xff]
    %v78 = vld [vmem:[#allocation4 + $0xc0] sm:$0xff]
    %v79 = vld [vmem:[#allocation4 + $0xc8] sm:$0xff]
    %v80 = vld [vmem:[#allocation4 + $0xd0] sm:$0xff]
    %v81 = vld [vmem:[#allocation4 + $0xd8] sm:$0xff]
    %v82 = vld [vmem:[#allocation4 + $0xe0] sm:$0xff]
    %v83 = vld [vmem:[#allocation4 + $0xe8] sm:$0xff]
    %v84 = vld [vmem:[#allocation4 + $0xf0] sm:$0xff]
    %v85 = vld [vmem:[#allocation4 + $0xf8] sm:$0xff]
    %v86 = vld [vmem:[#allocation4 + $0x100] sm:$0xff]
    %v87 = vld [vmem:[#allocation4 + $0x108] sm:$0xff]
    %v88 = vld [vmem:[#allocation4 + $0x110] sm:$0xff]
    %v89 = vld [vmem:[#allocation4 + $0x118] sm:$0xff]
    %v90 = vld [vmem:[#allocation4 + $0x120] sm:$0x1]
    %v91 = vld [vmem:[#allocation6] sm:$0xff]
    %v92 = vld [vmem:[#allocation6 + $0x8] sm:$0xff]
    %v93 = vld [vmem:[#allocation6 + $0x10] sm:$0xff]
    %v94 = vld [vmem:[#allocation6 + $0x18] sm:$0xff]
    %v95 = vld [vmem:[#allocation6 + $0x20] sm:$0xff]
    %v96 = vld [vmem:[#allocation6 + $0x28] sm:$0xff]
    %v97 = vld [vmem:[#allocation6 + $0x30] sm:$0xff]
    %v98 = vld [vmem:[#allocation6 + $0x38] sm:$0xff]
    %v99 = vld [vmem:[#allocation6 + $0x40] sm:$0xff]
    %v100 = vld [vmem:[#allocation6 + $0x48] sm:$0xff]
    %v101 = vld [vmem:[#allocation6 + $0x50] sm:$0xff]
    %v102 = vld [vmem:[#allocation6 + $0x58] sm:$0xff]
    %v103 = vld [vmem:[#allocation6 + $0x60] sm:$0xff]
    %v104 = vld [vmem:[#allocation6 + $0x68] sm:$0xff]
    %v105 = vld [vmem:[#allocation6 + $0x70] sm:$0xff]
    %v106 = vld [vmem:[#allocation6 + $0x78] sm:$0xff]
    %v107 = vld [vmem:[#allocation6 + $0x80] sm:$0xff]
    %v108 = vld [vmem:[#allocation6 + $0x88] sm:$0xff]
    %v109 = vld [vmem:[#allocation6 + $0x90] sm:$0xff]
    %v110 = vld [vmem:[#allocation6 + $0x98] sm:$0xff]
    %v111 = vld [vmem:[#allocation6 + $0xa0] sm:$0xff]
    %v112 = vld [vmem:[#allocation6 + $0xa8] sm:$0xff]
    %v113 = vld [vmem:[#allocation6 + $0xb0] sm:$0xff]
    %v114 = vld [vmem:[#allocation6 + $0xb8] sm:$0xff]
    %v115 = vld [vmem:[#allocation6 + $0xc0] sm:$0xff]
    %v116 = vld [vmem:[#allocation6 + $0xc8] sm:$0xff]
    %v117 = vld [vmem:[#allocation6 + $0xd0] sm:$0xff]
    %v118 = vld [vmem:[#allocation6 + $0xd8] sm:$0xff]
    %v119 = vld [vmem:[#allocation6 + $0xe0] sm:$0xff]
    %v120 = vld [vmem:[#allocation6 + $0xe8] sm:$0xff]
    %v121 = vld [vmem:[#allocation6 + $0xf0] sm:$0xff]
    %v122 = vld [vmem:[#allocation6 + $0xf8] sm:$0xff]
    %s123 = scalar_lea.vmem [#allocation6], 256
    %v124 = vld [vmem:[%s123] ss:$8 sm:$0x3]
    %v125 = vld [vmem:[#allocation2] sm:$0xff]
    %v126 = vlaneseq
    %v127 = vshrl.u32 %v126, 7
    %v128 = vsub.s32 0, %v127
    %v129 = vrot.slane %v57, %v128
    %vm130 = vcmask 130048
    %v132 = vsel %vm130, %v125, 0
    %134 = vmatprep.subr.mxu0 0.0
    %135 = vmatpush1.msra.mxu0 %v55
    %136 = vmatprep.subr.mxu0 0.0
    %137 = vmatpush1.msra.mxu0 %v56
    %138 = vmatprep.subr.mxu0 0.0
    %139 = vmatpush1.msra.mxu0 0.0
    %140 = vmatprep.subr.mxu0 0.0
    %141 = vmatpush1.msra.mxu0 0.0
    %142 = vmatprep.subr.mxu0 0.0
    %143 = vmatpush1.msra.mxu0 0.0
    %144 = vmatprep.subr.mxu0 0.0
    %145 = vmatpush1.msra.mxu0 0.0
    %146 = vmatprep.subr.mxu0 0.0
    %147 = vmatpush1.msra.mxu0 0.0
    %148 = vmatprep.subr.mxu0 0.0
    %149 = vmatpush1.msra.mxu0 0.0
    %150 = vmatprep.subr.mxu0 0.0
    %151 = vmatpush1.msra.mxu0 0.0
    %152 = vmatprep.subr.mxu0 0.0
    %153 = vmatpush1.msra.mxu0 0.0
    %154 = vmatprep.subr.mxu0 0.0
    %155 = vmatpush1.msra.mxu0 0.0
    %156 = vmatprep.subr.mxu0 0.0
    %157 = vmatpush1.msra.mxu0 0.0
    %158 = vmatprep.subr.mxu0 0.0
    %159 = vmatpush1.msra.mxu0 0.0
    %160 = vmatprep.subr.mxu0 0.0
    %161 = vmatpush1.msra.mxu0 0.0
    %162 = vmatprep.subr.mxu0 0.0
    %163 = vmatpush1.msra.mxu0 0.0
    %164 = vmatprep.subr.mxu0 0.0
    %165 = vmatpush1.msra.mxu0 0.0
    %166 = vmatprep.subr.mxu0 0.0
    %167 = vmatpush1.msra.mxu0 0.0
    %168 = vmatprep.subr.mxu0 0.0
    %169 = vmatpush1.msra.mxu0 0.0
    %170 = vmatprep.subr.mxu0 0.0
    %171 = vmatpush1.msra.mxu0 0.0
    %172 = vmatprep.subr.mxu0 0.0
    %173 = vmatpush1.msra.mxu0 0.0
    %174 = vmatprep.subr.mxu0 0.0
    %175 = vmatpush1.msra.mxu0 0.0
    %176 = vmatprep.subr.mxu0 0.0
    %177 = vmatpush1.msra.mxu0 0.0
    %178 = vmatprep.subr.mxu0 0.0
    %179 = vmatpush1.msra.mxu0 0.0
    %180 = vmatprep.subr.mxu0 0.0
    %181 = vmatpush1.msra.mxu0 0.0
    %182 = vmatprep.subr.mxu0 0.0
    %183 = vmatpush1.msra.mxu0 0.0
    %184 = vmatprep.subr.mxu0 0.0
    %185 = vmatpush1.msra.mxu0 0.0
    %186 = vmatprep.subr.mxu0 0.0
    %187 = vmatpush1.msra.mxu0 0.0
    %188 = vmatprep.subr.mxu0 0.0
    %189 = vmatpush1.msra.mxu0 0.0
    %190 = vmatprep.subr.mxu0 0.0
    %191 = vmatpush1.msra.mxu0 0.0
    %192 = vmatprep.subr.mxu0 0.0
    %193 = vmatpush1.msra.mxu0 0.0
    %194 = vmatprep.subr.mxu0 0.0
    %195 = vmatpush1.msra.mxu0 0.0
    %196 = vmatprep.subr.mxu0 0.0
    %197 = vmatpush1.msra.mxu0 0.0
    %198 = vmatprep.mubr.f32.mxu0 0.0
    %199 = vmatmul.mubr.f32.gmra.mrb[0].mxu0 %v132
    %v200 = vpop.f32.mrb[0].mxu0
    %v201 = vadd.f32 %v129, %v200
    %v202 = vpop.f32.mrb[0].mxu0
    %203 = vdwg.mxu0
    %v204 = vmax.f32 %v201, 0.0
    %v206 = vlaneseq
    %v207 = vshrl.u32 %v206, 7
    %v208 = vsub.s32 0, %v207
    %v209 = vrot.slane %v124, %v208
    %v210 = vlaneseq
    %v211 = vshrl.u32 %v210, 7
    %v212 = vsub.s32 1, %v211
    %v213 = vrot.slane %v124, %v212
    %216 = vmatprep.subr.mxu0 %v92
    %217 = vmatpush1.msra.mxu0 %v91
    %218 = vmatprep.subr.mxu0 %v94
    %219 = vmatpush1.msra.mxu0 %v93
    %220 = vmatprep.subr.mxu0 %v96
    %221 = vmatpush1.msra.mxu0 %v95
    %222 = vmatprep.subr.mxu0 %v98
    %223 = vmatpush1.msra.mxu0 %v97
    %224 = vmatprep.subr.mxu0 %v100
    %225 = vmatpush1.msra.mxu0 %v99
    %226 = vmatprep.subr.mxu0 %v102
    %227 = vmatpush1.msra.mxu0 %v101
    %228 = vmatprep.subr.mxu0 %v104
    %229 = vmatpush1.msra.mxu0 %v103
    %230 = vmatprep.subr.mxu0 %v106
    %231 = vmatpush1.msra.mxu0 %v105
    %232 = vmatprep.subr.mxu0 %v108
    %233 = vmatpush1.msra.mxu0 %v107
    %234 = vmatprep.subr.mxu0 %v110
    %235 = vmatpush1.msra.mxu0 %v109
    %236 = vmatprep.subr.mxu0 %v112
    %237 = vmatpush1.msra.mxu0 %v111
    %238 = vmatprep.subr.mxu0 %v114
    %239 = vmatpush1.msra.mxu0 %v113
    %240 = vmatprep.subr.mxu0 %v116
    %241 = vmatpush1.msra.mxu0 %v115
    %242 = vmatprep.subr.mxu0 %v118
    %243 = vmatpush1.msra.mxu0 %v117
    %244 = vmatprep.subr.mxu0 %v120
    %245 = vmatpush1.msra.mxu0 %v119
    %246 = vmatprep.subr.mxu0 %v122
    %247 = vmatpush1.msra.mxu0 %v121
    %248 = vmatprep.subr.mxu0 0.0
    %249 = vmatpush1.msra.mxu0 0.0
    %250 = vmatprep.subr.mxu0 0.0
    %251 = vmatpush1.msra.mxu0 0.0
    %252 = vmatprep.subr.mxu0 0.0
    %253 = vmatpush1.msra.mxu0 0.0
    %254 = vmatprep.subr.mxu0 0.0
    %255 = vmatpush1.msra.mxu0 0.0
    %256 = vmatprep.subr.mxu0 0.0
    %257 = vmatpush1.msra.mxu0 0.0
    %258 = vmatprep.subr.mxu0 0.0
    %259 = vmatpush1.msra.mxu0 0.0
    %260 = vmatprep.subr.mxu0 0.0
    %261 = vmatpush1.msra.mxu0 0.0
    %262 = vmatprep.subr.mxu0 0.0
    %263 = vmatpush1.msra.mxu0 0.0
    %264 = vmatprep.subr.mxu0 0.0
    %265 = vmatpush1.msra.mxu0 0.0
    %266 = vmatprep.subr.mxu0 0.0
    %267 = vmatpush1.msra.mxu0 0.0
    %268 = vmatprep.subr.mxu0 0.0
    %269 = vmatpush1.msra.mxu0 0.0
    %270 = vmatprep.subr.mxu0 0.0
    %271 = vmatpush1.msra.mxu0 0.0
    %272 = vmatprep.subr.mxu0 0.0
    %273 = vmatpush1.msra.mxu0 0.0
    %274 = vmatprep.subr.mxu0 0.0
    %275 = vmatpush1.msra.mxu0 0.0
    %276 = vmatprep.subr.mxu0 0.0
    %277 = vmatpush1.msra.mxu0 0.0
    %278 = vmatprep.subr.mxu0 0.0
    %279 = vmatpush1.msra.mxu0 0.0
    %280 = vmatprep.mubr.f32.mxu0 0.0
    %281 = vmatmul.mubr.f32.gmra.mrb[0].mxu0 %v204
    %v282 = vpop.f32.mrb[0].mxu0
    %v283 = vadd.f32 %v209, %v282
    %v284 = vpop.f32.mrb[0].mxu0
    %v285 = vadd.f32 %v213, %v284
    %286 = vdwg.mxu0
    %v287 = vmax.f32 %v283, 0.0
    %v288 = vmax.f32 %v285, 0.0
    %v289 = vlaneseq
    %v290 = vshrl.u32 %v289, 7
    %v291 = vsub.s32 0, %v290
    %v292 = vrot.slane %v90, %v291
    %293 = vmatprep.subr.mxu0 0.0
    %294 = vmatpush1.msra.mxu0 %v58
    %295 = vmatprep.subr.mxu0 0.0
    %296 = vmatpush1.msra.mxu0 %v59
    %297 = vmatprep.subr.mxu0 0.0
    %298 = vmatpush1.msra.mxu0 %v60
    %299 = vmatprep.subr.mxu0 0.0
    %300 = vmatpush1.msra.mxu0 %v61
    %301 = vmatprep.subr.mxu0 0.0
    %302 = vmatpush1.msra.mxu0 %v62
    %303 = vmatprep.subr.mxu0 0.0
    %304 = vmatpush1.msra.mxu0 %v63
    %305 = vmatprep.subr.mxu0 0.0
    %306 = vmatpush1.msra.mxu0 %v64
    %307 = vmatprep.subr.mxu0 0.0
    %308 = vmatpush1.msra.mxu0 %v65
    %309 = vmatprep.subr.mxu0 0.0
    %310 = vmatpush1.msra.mxu0 %v66
    %311 = vmatprep.subr.mxu0 0.0
    %312 = vmatpush1.msra.mxu0 %v67
    %313 = vmatprep.subr.mxu0 0.0
    %314 = vmatpush1.msra.mxu0 %v68
    %315 = vmatprep.subr.mxu0 0.0
    %316 = vmatpush1.msra.mxu0 %v69
    %317 = vmatprep.subr.mxu0 0.0
    %318 = vmatpush1.msra.mxu0 %v70
    %319 = vmatprep.subr.mxu0 0.0
    %320 = vmatpush1.msra.mxu0 %v71
    %321 = vmatprep.subr.mxu0 0.0
    %322 = vmatpush1.msra.mxu0 %v72
    %323 = vmatprep.subr.mxu0 0.0
    %324 = vmatpush1.msra.mxu0 %v73
    %325 = vmatprep.subr.mxu0 0.0
    %326 = vmatpush1.msra.mxu0 %v74
    %327 = vmatprep.subr.mxu0 0.0
    %328 = vmatpush1.msra.mxu0 %v75
    %329 = vmatprep.subr.mxu0 0.0
    %330 = vmatpush1.msra.mxu0 %v76
    %331 = vmatprep.subr.mxu0 0.0
    %332 = vmatpush1.msra.mxu0 %v77
    %333 = vmatprep.subr.mxu0 0.0
    %334 = vmatpush1.msra.mxu0 %v78
    %335 = vmatprep.subr.mxu0 0.0
    %336 = vmatpush1.msra.mxu0 %v79
    %337 = vmatprep.subr.mxu0 0.0
    %338 = vmatpush1.msra.mxu0 %v80
    %339 = vmatprep.subr.mxu0 0.0
    %340 = vmatpush1.msra.mxu0 %v81
    %341 = vmatprep.subr.mxu0 0.0
    %342 = vmatpush1.msra.mxu0 %v82
    %343 = vmatprep.subr.mxu0 0.0
    %344 = vmatpush1.msra.mxu0 %v83
    %345 = vmatprep.subr.mxu0 0.0
    %346 = vmatpush1.msra.mxu0 %v84
    %347 = vmatprep.subr.mxu0 0.0
    %348 = vmatpush1.msra.mxu0 %v85
    %349 = vmatprep.subr.mxu0 0.0
    %350 = vmatpush1.msra.mxu0 %v86
    %351 = vmatprep.subr.mxu0 0.0
    %352 = vmatpush1.msra.mxu0 %v87
    %353 = vmatprep.subr.mxu0 0.0
    %354 = vmatpush1.msra.mxu0 %v88
    %355 = vmatprep.subr.mxu0 0.0
    %356 = vmatpush1.msra.mxu0 %v89
    %357 = vmatprep.mubr.f32.mxu0 %v288
    %358 = vmatmul.mubr.f32.gmra.mrb[0].mxu0 %v287
    %v359 = vpop.f32.mrb[0].mxu0
    %v360 = vadd.f32 %v292, %v359
    %v361 = vpop.f32.mrb[0].mxu0
    %362 = vdwg.mxu0
    %364 = vset.pattern.permute.xlu0 4
    %365 = vperm.xlu0 %364, %v360
    %v366 = vpop.permute.xlu0 %365
    %v368 = vadd.f32 %v360, %v366
    %369 = vst [vmem:[%s3] sm:$0xff] %v368
    %370 = vadd.xlane.f32.xlu0 %v360
    %v371 = vpop.xlane.xlu0 %370
    %v372 = vsub.f32 %v371, %v360
    %374 = vrot.lane.b32.xlu0 %v372, 124
    %v375 = vpop.permute.xlu0 %374
    %vm377 = vcmask 7168
    %v378 = vsel %vm377, %v375, 0.0
    %379 = vadd.xlane.f32.xlu0 %v378
    %v380 = vpop.xlane.xlu0 %379
    %v381 = vrot.slane %v380, 4
    %v382 = vadd.f32 %v380, %v381
    %v383 = vrot.slane %v382, 2
    %v384 = vadd.f32 %v382, %v383
    %v385 = vrot.slane %v384, 1
    %v386 = vadd.f32 %v384, %v385
    %s387 = vtos %v386
    %v388 = vstv %s387
    %389 = vst [vmem:[%s4] sm:$0xff] %v388
    // Predicated region
    $region26: #{_ddqn_forward_packed.1} parent=1 // pred_check
      _
    $region27: #{_ddqn_forward_packed.1} parent=1 // pred_check_branch
      %391 = sbr.rel (0) target = $region29
    $region28: #{_ddqn_forward_packed.1} parent=1 // pred_region
      _
    $region29: #{_ddqn_forward_packed.1} parent=1 // pred_fallthru
      _
    // Predicated region
    $region30: #{_ddqn_forward_packed.1} parent=1 // pred_check
      _
    $region31: #{_ddqn_forward_packed.1} parent=1 // pred_check_branch
      %393 = sbr.rel (0) target = $region33
    $region32: #{_ddqn_forward_packed.1} parent=1 // pred_region
      _
    $region33: #{_ddqn_forward_packed.1} parent=1 // pred_fallthru
      _
    // Predicated region
    $region34: #{_ddqn_forward_packed.1} parent=1 // pred_check
      _
    $region35: #{_ddqn_forward_packed.1} parent=1 // pred_check_branch
      %395 = sbr.rel (0) target = $region37
    $region36: #{_ddqn_forward_packed.1} parent=1 // pred_region
      _
    $region37: #{_ddqn_forward_packed.1} parent=1 // pred_fallthru
      _
    // Predicated region
    $region38: #{_ddqn_forward_packed.1} parent=1 // pred_check
      _
    $region39: #{_ddqn_forward_packed.1} parent=1 // pred_check_branch
      %397 = sbr.rel (0) target = $region41
    $region40: #{_ddqn_forward_packed.1} parent=1 // pred_region
      _
    $region41: #{_ddqn_forward_packed.1} parent=1 // pred_fallthru
      _
    %398 = vsyncpa [#allocation3], 1
    %399 = vsyncpa [#allocation5], 1

</llo_original>
